<compile_context>
chip_gen: v5e
topology: v5e:2x2
jax: 0.10.0
libtpu: 0.0.40
codegen_flags: <defaults>
</compile_context>

<pallas_src>
import jax
import jax.numpy as jnp
from jax.experimental import pallas as pl
from jax.experimental.pallas import tpu as pltpu


def _round_up(x, m):
    return (x + m - 1) // m * m


# -----------------------------------------------------------------------------
# Kernel 1: tiled linear  y = x @ W_t + b   (bf16 MXU operands, f32 accumulate)
# -----------------------------------------------------------------------------
def _linear_kernel(x_ref, w_ref, b_ref, o_ref):
    acc = jnp.dot(x_ref[...], w_ref[...], preferred_element_type=jnp.float32)
    o_ref[...] = (acc + b_ref[...]).astype(o_ref.dtype)


def pallas_linear(x, w_t, b, *, tm=512):
    """x: (M, K), w_t: (K, N) pre-transposed, b: (1, N) -> (M, N) float32.

    Operands are cast to bf16 (MXU-native on v5e/v6e/v7x); accumulation stays
    f32.  Activations stream in tm-row tiles (pipelined), the weight stays
    resident in VMEM (constant index map), and the M grid axis is "parallel"
    so it can shard across both TensorCores on v7x.
    """
    M, K = x.shape
    _, N = w_t.shape
    x = x.astype(jnp.bfloat16)
    w_t = w_t.astype(jnp.bfloat16)
    b = b.astype(jnp.float32)

    tm = min(tm, _round_up(M, 8))
    m_pad = _round_up(M, tm)
    if m_pad != M:
        x = jnp.pad(x, ((0, m_pad - M), (0, 0)))

    out = pl.pallas_call(
        _linear_kernel,
        out_shape=jax.ShapeDtypeStruct((m_pad, N), jnp.float32),
        grid_spec=pltpu.PrefetchScalarGridSpec(
            num_scalar_prefetch=0,
            grid=(m_pad // tm,),
            in_specs=[
                pl.BlockSpec((tm, K), lambda i: (i, 0)),   # activations stream
                pl.BlockSpec((K, N), lambda i: (0, 0)),    # weight stays resident
                pl.BlockSpec((1, N), lambda i: (0, 0)),
            ],
            out_specs=pl.BlockSpec((tm, N), lambda i: (i, 0)),
        ),
        compiler_params=pltpu.CompilerParams(
            dimension_semantics=("parallel",),
            vmem_limit_bytes=32 * 1024 * 1024,
        ),
    )(x, w_t, b)
    return out[:M] if m_pad != M else out


# -----------------------------------------------------------------------------
# Kernel 2: text-guided soft-sort pooling over frames (no proj inside), batched
# -----------------------------------------------------------------------------
def _pool_kernel(tau_ref, img_ref, txt_ref, o_ref):
    # img_ref: (Bt, F, S, H) f32   txt_ref: (Bt, 1, H) f32   o_ref: (Bt, S, H) bf16
    img = img_ref[...]
    txt = txt_ref[...]
    eps2 = 1e-24  # clamp squared norms at eps^2  (== F.normalize eps=1e-12)

    # Factored cosine similarity: sim = (img.txt) * rsqrt(|img|^2) * rsqrt(|txt|^2)
    raw = jnp.sum(img * txt[:, :, None, :], axis=-1)               # (Bt, F, S)
    img_ss = jnp.sum(img * img, axis=-1)                           # (Bt, F, S)
    txt_ss = jnp.sum(txt * txt, axis=-1, keepdims=True)            # (Bt, 1, 1)
    sim = (raw
           * jax.lax.rsqrt(jnp.maximum(img_ss, eps2))              # EUP
           * jax.lax.rsqrt(jnp.maximum(txt_ss, eps2)))             # (Bt, F, S)

    # TrainableSoftSort: softmax(sim / tau) over the frame axis
    logits = sim * (1.0 / tau_ref[0])
    m = jnp.max(logits, axis=1, keepdims=True)
    e = jnp.exp(logits - m)
    denom = jnp.sum(e, axis=1, keepdims=True)
    w = e * pl.reciprocal(denom, approx=True)                      # (Bt, F, S)

    # Weighted sum over frames with ORIGINAL (un-normalized) embeddings
    fused = jnp.sum(img * w[:, :, :, None], axis=1)                # (Bt, S, H)
    o_ref[...] = fused.astype(o_ref.dtype)


def _choose_bt(N, F, S, H):
    # target ~256 fused rows per grid step; keep the double-buffered img block
    # well under the scoped VMEM budget (v7x has only 64 MiB physical / 32 scoped)
    bt_rows = max(1, -(-256 // S))
    bt_vmem = max(1, (8 * 1024 * 1024) // (2 * F * S * H * 4))
    return max(1, min(N, bt_rows, bt_vmem))


def pallas_tg_softsort_pool(img_feats, text_emb, tau, *, bt=None):
    """img_feats: (N, F, S, H) f32, text_emb: (N, H) f32 -> fused (N, S, H) bf16."""
    N, F, S, H = img_feats.shape
    if bt is None:
        bt = _choose_bt(N, F, S, H)
    bt = max(1, min(bt, N))
    n_pad = _round_up(N, bt)
    if n_pad != N:
        img_feats = jnp.pad(img_feats, ((0, n_pad - N), (0, 0), (0, 0), (0, 0)))
        text_emb = jnp.pad(text_emb, ((0, n_pad - N), (0, 0)))
    txt3 = text_emb.reshape(n_pad, 1, H)  # batch is a leading (untiled) dim

    out = pl.pallas_call(
        _pool_kernel,
        out_shape=jax.ShapeDtypeStruct((n_pad, S, H), jnp.bfloat16),
        grid_spec=pltpu.PrefetchScalarGridSpec(
            num_scalar_prefetch=0,
            grid=(n_pad // bt,),
            in_specs=[
                pl.BlockSpec((1,), lambda i: (0,), memory_space=pltpu.SMEM),
                pl.BlockSpec((bt, F, S, H), lambda i: (i, 0, 0, 0)),
                pl.BlockSpec((bt, 1, H), lambda i: (i, 0, 0)),
            ],
            out_specs=pl.BlockSpec((bt, S, H), lambda i: (i, 0, 0)),
        ),
        compiler_params=pltpu.CompilerParams(
            dimension_semantics=("parallel",),
            vmem_limit_bytes=32 * 1024 * 1024,
        ),
    )(tau, img_feats, txt3)
    return out[:N] if n_pad != N else out


# -----------------------------------------------------------------------------
# TSVLM forward (merged-embedding construction)
# -----------------------------------------------------------------------------
def tsvlm_merged_embedding(params, text_enc, frame_features):
    """
    text_enc:        (N, T) int32 token ids
    frame_features:  (N, F, S, MV) float32 post-backbone per-frame features
    returns merged embedding (N, T + S, H) float32
    """
    N, F, S, MV = frame_features.shape
    H = params["embed_table"].shape[1]

    # text token embeddings + modal embedding (index 0 broadcast over tokens)
    text_emb = jnp.take(params["embed_table"], text_enc, axis=0)      # (N, T, H)
    text_emb = text_emb + params["modal_emb"][0][None, None, :]

    # mean-pooled text embedding used as the sorting guide
    text_mean = jnp.mean(text_emb, axis=1)                            # (N, H)

    # img_projection_layer: (N*F*S, MV) @ (MV, H) + b   -- Pallas tiled matmul
    x = frame_features.reshape(N * F * S, MV)
    img_proj = pallas_linear(x, params["img_proj_w_t"], params["img_proj_b"])
    img_proj = img_proj.reshape(N, F, S, H)

    # text-guided soft-sort pooling over frames  -- Pallas fused kernel
    fused = pallas_tg_softsort_pool(img_proj, text_mean, params["tau"])  # (N,S,H)

    # pooling proj Linear(H, H) on the whole (N*S, H) slab -- Pallas tiled matmul
    fused_img = pallas_linear(
        fused.reshape(N * S, H), params["pool_proj_w_t"], params["pool_proj_b"])
    fused_img = fused_img.reshape(N, S, H)

    # concat text tokens with fused image tokens
    return jnp.concatenate([text_emb, fused_img], axis=1)             # (N, T+S, H)


# -----------------------------------------------------------------------------
# Pure-JAX reference (same bf16-stored weights, f32 math) for validation
# -----------------------------------------------------------------------------
def _reference_merged_embedding(params, text_enc, frame_features):
    N, F, S, MV = frame_features.shape
    H = params["embed_table"].shape[1]
    text_emb = jnp.take(params["embed_table"], text_enc, axis=0)
    text_emb = text_emb + params["modal_emb"][0][None, None, :]
    text_mean = jnp.mean(text_emb, axis=1)

    w1 = params["img_proj_w_t"].astype(jnp.float32)
    img_proj = frame_features.reshape(N * F * S, MV) @ w1 + params["img_proj_b"]
    img_proj = img_proj.reshape(N, F, S, H)

    eps = 1e-12
    img_n = img_proj / jnp.maximum(
        jnp.linalg.norm(img_proj, axis=-1, keepdims=True), eps)
    txt_n = text_mean / jnp.maximum(
        jnp.linalg.norm(text_mean, axis=-1, keepdims=True), eps)
    sim = jnp.einsum("nfsh,nh->nfs", img_n, txt_n)
    w = jax.nn.softmax(sim / params["tau"][0], axis=1)
    fused = jnp.einsum("nfsh,nfs->nsh", img_proj, w)

    w2 = params["pool_proj_w_t"].astype(jnp.float32)
    fused_img = fused.reshape(N * S, H) @ w2 + params["pool_proj_b"]
    fused_img = fused_img.reshape(N, S, H)
    return jnp.concatenate([text_emb, fused_img], axis=1)


def init_params(key, vocab, hidden, mv_hidden):
    ks = jax.random.split(key, 6)
    return {
        "embed_table": 0.02 * jax.random.normal(ks[0], (vocab, hidden), jnp.float32),
        "modal_emb":   0.02 * jax.random.normal(ks[1], (2, hidden), jnp.float32),
        # nn.Linear weights stored pre-transposed (in, out) and pre-cast to bf16
        # (MXU-native; halves weight HBM traffic).  Biases stay f32.
        "img_proj_w_t": ((1.0 / jnp.sqrt(mv_hidden)) *
                         jax.random.normal(ks[2], (mv_hidden, hidden), jnp.float32)
                         ).astype(jnp.bfloat16),
        "img_proj_b":   0.01 * jax.random.normal(ks[3], (1, hidden), jnp.float32),
        "pool_proj_w_t": ((1.0 / jnp.sqrt(hidden)) *
                          jax.random.normal(ks[4], (hidden, hidden), jnp.float32)
                          ).astype(jnp.bfloat16),
        "pool_proj_b":  0.01 * jax.random.normal(ks[5], (1, hidden), jnp.float32),
        "tau": jnp.array([0.1], jnp.float32),   # TrainableSoftSort init_tau
    }


if __name__ == "__main__":
    # Small shapes consistent with the forward pass:
    #   batch N=2, text tokens T=6, frames F=4, image tokens S=8,
    #   d_model H=128, MobileViT hidden MV=256, vocab=50.
    # (Real model: S=49 -> pad to 56 before the Pallas calls to keep the
    #  sublane axis a multiple of 8.)
    N, T, F, S, H, MV, VOCAB = 2, 6, 4, 8, 128, 256, 50

    key = jax.random.PRNGKey(0)
    k_params, k_text, k_img = jax.random.split(key, 3)

    params = init_params(k_params, VOCAB, H, MV)
    text_enc = jax.random.randint(k_text, (N, T), 0, VOCAB, dtype=jnp.int32)
    frame_features = jax.random.normal(k_img, (N, F, S, MV), jnp.float32)

    merged = tsvlm_merged_embedding(params, text_enc, frame_features)
    merged = jax.block_until_ready(merged)

    assert merged.shape == (N, T + S, H), merged.shape
    assert bool(jnp.all(jnp.isfinite(merged)))

    # Validate against the f32 pure-JAX reference (bf16 matmuls -> loose tol).
    ref = jax.block_until_ready(
        _reference_merged_embedding(params, text_enc, frame_features))
    max_err = float(jnp.max(jnp.abs(merged - ref)))
    assert max_err < 0.2, f"max abs error vs reference: {max_err}"

    print("KERNEL_OK")
</pallas_src>

<mosaic_0001>
module attributes {stable_mosaic.version = 11 : i64} {
  func.func @_linear_kernel(%arg0: i32, %arg1: memref<64x256xbf16, #tpu.memory_space<vmem>>, %arg2: memref<256x128xbf16, #tpu.memory_space<vmem>>, %arg3: memref<1x128xf32, #tpu.memory_space<vmem>>, %arg4: memref<64x128xf32, #tpu.memory_space<vmem>>) attributes {dimension_semantics = [#tpu.dimension_semantics<parallel>], iteration_bounds = array<i64: 1>, scalar_prefetch = 0 : i64, scratch_operands = 0 : i64, tpu.core_type = #tpu.core_type<tc>, window_params = [{transform_indices = @transform_0, window_bounds = array<i64: 64, 256>}, {pipeline_mode = #tpu.pipeline_mode<synchronous>, transform_indices = @transform_1, window_bounds = array<i64: 256, 128>}, {pipeline_mode = #tpu.pipeline_mode<synchronous>, transform_indices = @transform_2, window_bounds = array<i64: 1, 128>}, {transform_indices = @transform_3, window_bounds = array<i64: 64, 128>}]} {
    %c0 = arith.constant 0 : index
    %c0_0 = arith.constant 0 : index
    %0 = vector.load %arg1[%c0, %c0_0] : memref<64x256xbf16, #tpu.memory_space<vmem>>, vector<64x256xbf16>
    %c0_1 = arith.constant 0 : index
    %c0_2 = arith.constant 0 : index
    %1 = vector.load %arg2[%c0_1, %c0_2] : memref<256x128xbf16, #tpu.memory_space<vmem>>, vector<256x128xbf16>
    %cst = arith.constant dense<0.000000e+00> : vector<64x128xf32>
    %2 = tpu.matmul %0, %1, %cst {dimension_numbers = #tpu.dot_dimension_numbers<[1], [0], [0], [1], [0, 0, 1, 1], [], []>} : vector<64x256xbf16>, vector<256x128xbf16>, vector<64x128xf32> -> vector<64x128xf32>
    %c0_3 = arith.constant 0 : index
    %c0_4 = arith.constant 0 : index
    %3 = vector.load %arg3[%c0_3, %c0_4] : memref<1x128xf32, #tpu.memory_space<vmem>>, vector<1x128xf32>
    %4 = vector.broadcast %3 : vector<1x128xf32> to vector<64x128xf32>
    %5 = arith.addf %2, %4 : vector<64x128xf32>
    %c0_5 = arith.constant 0 : index
    %c0_6 = arith.constant 0 : index
    %6 = vector.load %arg4[%c0_5, %c0_6] : memref<64x128xf32, #tpu.memory_space<vmem>>, vector<64x128xf32>
    tpu.vector_store %arg4[%c0_5, %c0_6], %5 {strides = array<i32>} : memref<64x128xf32, #tpu.memory_space<vmem>>, vector<64x128xf32>,
    return
  }
  func.func @transform_0(%arg0: i32) -> (i32, i32) {
    %c0_i32 = arith.constant 0 : i32
    %c0_i32_0 = arith.constant 0 : i32
    return %arg0, %c0_i32 : i32, i32
  }
  func.func @transform_1(%arg0: i32) -> (i32, i32) {
    %c0_i32 = arith.constant 0 : i32
    %c0_i32_0 = arith.constant 0 : i32
    %c0_i32_1 = arith.constant 0 : i32
    return %c0_i32, %c0_i32_0 : i32, i32
  }
  func.func @transform_2(%arg0: i32) -> (i32, i32) {
    %c0_i32 = arith.constant 0 : i32
    %c0_i32_0 = arith.constant 0 : i32
    %c0_i32_1 = arith.constant 0 : i32
    return %c0_i32, %c0_i32_0 : i32, i32
  }
  func.func @transform_3(%arg0: i32) -> (i32, i32) {
    %c0_i32 = arith.constant 0 : i32
    %c0_i32_0 = arith.constant 0 : i32
    return %arg0, %c0_i32 : i32, i32
  }
}

</mosaic_0001>

<llo_original>
// kernel: tpu_custom_call.1
$region0: #{tpu_custom_call.1}
  #allocation0 [shape = 'u32[]', space=smem, size = 0x4, offset = 0x4, fixed_abs, tag = 'smem constant byte address 0x4 - core index']
  #allocation1 [shape = 'u32[72,128]{1,0:T(1,128)}', space=vmem, size = 0x9000, scoped, tag = 'internal scratch']
  %s0 = inlined_call_operand.hbm [shape: bf16[64,256], index: 0, kind: input, shape index: {}]
  %s1 = inlined_call_operand.hbm [shape: bf16[256,128], index: 1, kind: input, shape index: {}]
  %s2 = inlined_call_operand.vmem [shape: f32[1,128], index: 2, kind: input, shape index: {}]
  %s3 = inlined_call_operand.hbm [shape: f32[64,128], index: 3, kind: output, shape index: {}]
  %s4 = sld [smem:[#allocation0]]
  $region30: #{tpu_custom_call.1} parent=0
    _
  %s6 = ssub.s32 1, %s4
  %s7 = scalar_select 0, %s6, %s4
  $region1: #{tpu_custom_call.1} parent=0
    #allocation2 [shape = 'u8[32768]{0}', space=vmem, size = 0x8000, scoped, tag = 'input window, operand 0, single buffered']
    #allocation3 [shape = 's32[1]{0}', space=sflag, size = 0x4, scoped, tag = 'scoped memory for tpu_custom_call.1']
    #allocation4 [shape = 's32[1]{0}', space=sflag, size = 0x4, scoped, tag = 'scoped memory for tpu_custom_call.1']
    #allocation5 [shape = 'u8[65536]{0}', space=vmem, size = 0x10000, scoped, tag = 'input window, operand 1, single buffered']
    #allocation6 [shape = 's32[1]{0}', space=sflag, size = 0x4, scoped, tag = 'scoped memory for tpu_custom_call.1']
    #allocation7 [shape = 'u8[32768]{0}', space=vmem, size = 0x8000, scoped, tag = 'output window, operand 0, single buffered']
    %8 = vsyncpa [#allocation3], 0
    %9 = vsyncpa [#allocation6], 0
    %10 = vsyncpa [#allocation4], 0
    // Predicated region
    $region2: #{tpu_custom_call.1} parent=1 // pred_check
      _
    $region3: #{tpu_custom_call.1} parent=1 // pred_check_branch
      %12 = sbr.rel (0) target = $region5
    $region4: #{tpu_custom_call.1} parent=1 // pred_region
      %14 = vsyncadd [#allocation3], 0
      %s15 = sshll.u32 %s0, 4
      %s16 = int_to_ptr.hbm [resolvable:$true] %s15
      %s17 = sshll.u32 [#allocation2], 4
      %s18 = int_to_ptr.vmem [resolvable:$true] %s17
      %23 = dma.hbm_to_vmem [thread:$0]  %s16, 1024, %s18, [#allocation3], 128, 128, 8
    $region5: #{tpu_custom_call.1} parent=1 // pred_fallthru
      _
    // Predicated region
    $region6: #{tpu_custom_call.1} parent=1 // pred_check
      _
    $region7: #{tpu_custom_call.1} parent=1 // pred_check_branch
      %25 = sbr.rel (0) target = $region9
    $region8: #{tpu_custom_call.1} parent=1 // pred_region
      %27 = vsyncadd [#allocation6], 0
      %s28 = sshll.u32 %s1, 4
      %s29 = int_to_ptr.hbm [resolvable:$true] %s28
      %s30 = sshll.u32 [#allocation5], 4
      %s31 = int_to_ptr.vmem [resolvable:$true] %s30
      %36 = dma.hbm_to_vmem [thread:$0]  %s29, 2048, %s31, [#allocation6], 64, 64, 4
    $region9: #{tpu_custom_call.1} parent=1 // pred_fallthru
      _
    // Predicated region
    $region10: #{tpu_custom_call.1} parent=1 // pred_check
      _
    $region11: #{tpu_custom_call.1} parent=1 // pred_check_branch
      %38 = sbr.rel (0) target = $region13
    $region12: #{tpu_custom_call.1} parent=1 // pred_region
      _
    $region13: #{tpu_custom_call.1} parent=1 // pred_fallthru
      _
    // Predicated region
    $region14: #{tpu_custom_call.1} parent=1 // pred_check
      _
    $region15: #{tpu_custom_call.1} parent=1 // pred_check_branch
      %40 = sbr.rel (0) target = $region17
    $region16: #{tpu_custom_call.1} parent=1 // pred_region
      %42 = dma.done [#allocation3], 1024
    $region17: #{tpu_custom_call.1} parent=1 // pred_fallthru
      _
    // Predicated region
    $region18: #{tpu_custom_call.1} parent=1 // pred_check
      _
    $region19: #{tpu_custom_call.1} parent=1 // pred_check_branch
      %44 = sbr.rel (0) target = $region21
    $region20: #{tpu_custom_call.1} parent=1 // pred_region
      %46 = dma.done [#allocation6], 2048
    $region21: #{tpu_custom_call.1} parent=1 // pred_fallthru
      _
    %v47 = vld [vmem:[#allocation2] sm:$0xff]
    %v48 = vld [vmem:[#allocation2 + $0x8] sm:$0xff]
    %v49 = vld [vmem:[#allocation2 + $0x10] sm:$0xff]
    %v50 = vld [vmem:[#allocation2 + $0x18] sm:$0xff]
    %v51 = vld [vmem:[#allocation2 + $0x20] sm:$0xff]
    %v52 = vld [vmem:[#allocation2 + $0x28] sm:$0xff]
    %v53 = vld [vmem:[#allocation2 + $0x30] sm:$0xff]
    %v54 = vld [vmem:[#allocation2 + $0x38] sm:$0xff]
    %v55 = vld [vmem:[#allocation5] sm:$0xf]
    %v56 = vld [vmem:[#allocation5 + $0x4] sm:$0xf]
    %v57 = vld [vmem:[#allocation5 + $0x8] sm:$0xf]
    %v58 = vld [vmem:[#allocation5 + $0xc] sm:$0xf]
    %v59 = vld [vmem:[#allocation5 + $0x10] sm:$0xf]
    %v60 = vld [vmem:[#allocation5 + $0x14] sm:$0xf]
    %v61 = vld [vmem:[#allocation5 + $0x18] sm:$0xf]
    %v62 = vld [vmem:[#allocation5 + $0x1c] sm:$0xf]
    %v63 = vld [vmem:[#allocation5 + $0x20] sm:$0xf]
    %v64 = vld [vmem:[#allocation5 + $0x24] sm:$0xf]
    %v65 = vld [vmem:[#allocation5 + $0x28] sm:$0xf]
    %v66 = vld [vmem:[#allocation5 + $0x2c] sm:$0xf]
    %v67 = vld [vmem:[#allocation5 + $0x30] sm:$0xf]
    %v68 = vld [vmem:[#allocation5 + $0x34] sm:$0xf]
    %v69 = vld [vmem:[#allocation5 + $0x38] sm:$0xf]
    %v70 = vld [vmem:[#allocation5 + $0x3c] sm:$0xf]
    %v71 = vld [vmem:[#allocation5 + $0x40] sm:$0xf]
    %v72 = vld [vmem:[#allocation5 + $0x44] sm:$0xf]
    %v73 = vld [vmem:[#allocation5 + $0x48] sm:$0xf]
    %v74 = vld [vmem:[#allocation5 + $0x4c] sm:$0xf]
    %v75 = vld [vmem:[#allocation5 + $0x50] sm:$0xf]
    %v76 = vld [vmem:[#allocation5 + $0x54] sm:$0xf]
    %v77 = vld [vmem:[#allocation5 + $0x58] sm:$0xf]
    %v78 = vld [vmem:[#allocation5 + $0x5c] sm:$0xf]
    %v79 = vld [vmem:[#allocation5 + $0x60] sm:$0xf]
    %v80 = vld [vmem:[#allocation5 + $0x64] sm:$0xf]
    %v81 = vld [vmem:[#allocation5 + $0x68] sm:$0xf]
    %v82 = vld [vmem:[#allocation5 + $0x6c] sm:$0xf]
    %v83 = vld [vmem:[#allocation5 + $0x70] sm:$0xf]
    %v84 = vld [vmem:[#allocation5 + $0x74] sm:$0xf]
    %v85 = vld [vmem:[#allocation5 + $0x78] sm:$0xf]
    %v86 = vld [vmem:[#allocation5 + $0x7c] sm:$0xf]
    %v87 = vld [vmem:[%s2] sm:$0x1]
    %v89 = vperm.slane %v87, 0
    %v99 = vunpack.c.l.b16 %v47
    %v100 = vunpack.c.h.b16 %v47
    %v101 = vunpack.c.l.b16 %v48
    %v102 = vunpack.c.h.b16 %v48
    %v103 = vunpack.c.l.b16 %v49
    %v104 = vunpack.c.h.b16 %v49
    %v105 = vunpack.c.l.b16 %v50
    %v106 = vunpack.c.h.b16 %v50
    %v107 = vunpack.c.l.b16 %v51
    %v108 = vunpack.c.h.b16 %v51
    %v109 = vunpack.c.l.b16 %v52
    %v110 = vunpack.c.h.b16 %v52
    %v111 = vunpack.c.l.b16 %v53
    %v112 = vunpack.c.h.b16 %v53
    %v113 = vunpack.c.l.b16 %v54
    %v114 = vunpack.c.h.b16 %v54
    %v115 = vpack.c.b16 %v101, %v99
    %v116 = vpack.c.b16 %v102, %v100
    %v117 = vpack.c.b16 %v105, %v103
    %v118 = vpack.c.b16 %v106, %v104
    %v119 = vpack.c.b16 %v109, %v107
    %v120 = vpack.c.b16 %v110, %v108
    %v121 = vpack.c.b16 %v113, %v111
    %v122 = vpack.c.b16 %v114, %v112
    %v163 = vunpack.c.l.b16 %v55
    %v164 = vunpack.c.l.b16 %v56
    %v165 = vunpack.c.l.b16 %v57
    %v166 = vunpack.c.l.b16 %v58
    %v167 = vunpack.c.l.b16 %v59
    %v168 = vunpack.c.l.b16 %v60
    %v169 = vunpack.c.l.b16 %v61
    %v170 = vunpack.c.l.b16 %v62
    %v171 = vunpack.c.l.b16 %v63
    %v172 = vunpack.c.l.b16 %v64
    %v173 = vunpack.c.l.b16 %v65
    %v174 = vunpack.c.l.b16 %v66
    %v175 = vunpack.c.l.b16 %v67
    %v176 = vunpack.c.l.b16 %v68
    %v177 = vunpack.c.l.b16 %v69
    %v178 = vunpack.c.l.b16 %v70
    %v179 = vunpack.c.l.b16 %v71
    %v180 = vunpack.c.l.b16 %v72
    %v181 = vunpack.c.l.b16 %v73
    %v182 = vunpack.c.l.b16 %v74
    %v183 = vunpack.c.l.b16 %v75
    %v184 = vunpack.c.l.b16 %v76
    %v185 = vunpack.c.l.b16 %v77
    %v186 = vunpack.c.l.b16 %v78
    %v187 = vunpack.c.l.b16 %v79
    %v188 = vunpack.c.l.b16 %v80
    %v189 = vunpack.c.l.b16 %v81
    %v190 = vunpack.c.l.b16 %v82
    %v191 = vunpack.c.l.b16 %v83
    %v192 = vunpack.c.l.b16 %v84
    %v193 = vunpack.c.l.b16 %v85
    %v194 = vunpack.c.l.b16 %v86
    %v195 = vpack.c.b16 %v164, %v163
    %v196 = vpack.c.b16 %v166, %v165
    %v197 = vpack.c.b16 %v168, %v167
    %v198 = vpack.c.b16 %v170, %v169
    %v199 = vpack.c.b16 %v172, %v171
    %v200 = vpack.c.b16 %v174, %v173
    %v201 = vpack.c.b16 %v176, %v175
    %v202 = vpack.c.b16 %v178, %v177
    %v203 = vpack.c.b16 %v180, %v179
    %v204 = vpack.c.b16 %v182, %v181
    %v205 = vpack.c.b16 %v184, %v183
    %v206 = vpack.c.b16 %v186, %v185
    %v207 = vpack.c.b16 %v188, %v187
    %v208 = vpack.c.b16 %v190, %v189
    %v209 = vpack.c.b16 %v192, %v191
    %v210 = vpack.c.b16 %v194, %v193
    %227 = vmatpush.bf16.msra.mxu0 %v202
    %228 = vmatpush.bf16.msra.mxu0 %v201
    %229 = vmatpush.bf16.msra.mxu0 %v200
    %230 = vmatpush.bf16.msra.mxu0 %v199
    %231 = vmatpush.bf16.msra.mxu0 %v198
    %232 = vmatpush.bf16.msra.mxu0 %v197
    %233 = vmatpush.bf16.msra.mxu0 %v196
    %234 = vmatpush.bf16.msra.mxu0 %v195
    %235 = vmatmul.bf16.gmra.mxu0 %v115
    %v236 = vpop.f32.mrf.mxu0
    %v237 = vadd.f32 %v89, %v236
    %v238 = vpop.f32.mrf.mxu0
    %v239 = vadd.f32 %v89, %v238
    %240 = vmatmul.bf16.gmra.mxu0 %v117
    %v241 = vpop.f32.mrf.mxu0
    %v242 = vadd.f32 %v89, %v241
    %v243 = vpop.f32.mrf.mxu0
    %v244 = vadd.f32 %v89, %v243
    %245 = vmatmul.bf16.gmra.mxu0 %v119
    %v246 = vpop.f32.mrf.mxu0
    %v247 = vadd.f32 %v89, %v246
    %v248 = vpop.f32.mrf.mxu0
    %v249 = vadd.f32 %v89, %v248
    %250 = vmatmul.bf16.gmra.mxu0 %v121
    %v251 = vpop.f32.mrf.mxu0
    %v252 = vadd.f32 %v89, %v251
    %v253 = vpop.f32.mrf.mxu0
    %v254 = vadd.f32 %v89, %v253
    %255 = vdwg.mxu0
    %256 = vmatpush.bf16.msra.mxu0 %v210
    %257 = vmatpush.bf16.msra.mxu0 %v209
    %258 = vmatpush.bf16.msra.mxu0 %v208
    %259 = vmatpush.bf16.msra.mxu0 %v207
    %260 = vmatpush.bf16.msra.mxu0 %v206
    %261 = vmatpush.bf16.msra.mxu0 %v205
    %262 = vmatpush.bf16.msra.mxu0 %v204
    %263 = vmatpush.bf16.msra.mxu0 %v203
    %264 = vmatmul.bf16.gmra.mxu0 %v116
    %v265 = vpop.f32.mrf.mxu0
    %v266 = vadd.f32 %v237, %v265
    %v267 = vpop.f32.mrf.mxu0
    %v268 = vadd.f32 %v239, %v267
    %269 = vmatmul.bf16.gmra.mxu0 %v118
    %v270 = vpop.f32.mrf.mxu0
    %v271 = vadd.f32 %v242, %v270
    %v272 = vpop.f32.mrf.mxu0
    %v273 = vadd.f32 %v244, %v272
    %274 = vmatmul.bf16.gmra.mxu0 %v120
    %v275 = vpop.f32.mrf.mxu0
    %v276 = vadd.f32 %v247, %v275
    %v277 = vpop.f32.mrf.mxu0
    %v278 = vadd.f32 %v249, %v277
    %279 = vmatmul.bf16.gmra.mxu0 %v122
    %v280 = vpop.f32.mrf.mxu0
    %v281 = vadd.f32 %v252, %v280
    %v282 = vpop.f32.mrf.mxu0
    %v283 = vadd.f32 %v254, %v282
    %284 = vdwg.mxu0
    %285 = vst [vmem:[#allocation7] sm:$0xff] %v266
    %286 = vst [vmem:[#allocation7 + $0x8] sm:$0xff] %v268
    %287 = vst [vmem:[#allocation7 + $0x10] sm:$0xff] %v271
    %288 = vst [vmem:[#allocation7 + $0x18] sm:$0xff] %v273
    %289 = vst [vmem:[#allocation7 + $0x20] sm:$0xff] %v276
    %290 = vst [vmem:[#allocation7 + $0x28] sm:$0xff] %v278
    %291 = vst [vmem:[#allocation7 + $0x30] sm:$0xff] %v281
    %292 = vst [vmem:[#allocation7 + $0x38] sm:$0xff] %v283
    // Predicated region
    $region22: #{tpu_custom_call.1} parent=1 // pred_check
      _
    $region23: #{tpu_custom_call.1} parent=1 // pred_check_branch
      %294 = sbr.rel (0) target = $region25
    $region24: #{tpu_custom_call.1} parent=1 // pred_region
      %296 = vsyncadd [#allocation4], 0
      %s297 = sshll.u32 [#allocation7], 4
      %s298 = int_to_ptr.vmem [resolvable:$true] %s297
      %s299 = sshll.u32 %s3, 4
      %s300 = int_to_ptr.hbm [resolvable:$true] %s299
      %305 = dma.vmem_to_hbm [thread:$0]  %s298, 1024, %s300, [#allocation4], 128, 128, 8
    $region25: #{tpu_custom_call.1} parent=1 // pred_fallthru
      _
    // Predicated region
    $region26: #{tpu_custom_call.1} parent=1 // pred_check
      _
    $region27: #{tpu_custom_call.1} parent=1 // pred_check_branch
      %307 = sbr.rel (0) target = $region29
    $region28: #{tpu_custom_call.1} parent=1 // pred_region
      %309 = dma.done [#allocation4], 1024
    $region29: #{tpu_custom_call.1} parent=1 // pred_fallthru
      _
    %310 = vsyncpa [#allocation3], 1
    %311 = vsyncpa [#allocation6], 1
    %312 = vsyncpa [#allocation4], 1

</llo_original>
